<compile_context>
chip_gen: v7x
topology: tpu7x:2x2x1
jax: 0.10.0
libtpu: 0.0.40
codegen_flags: <defaults>
</compile_context>

<pallas_src>
import functools

import jax
import jax.numpy as jnp
from jax.experimental import pallas as pl
from jax.experimental.pallas import tpu as pltpu


def _pe_kernel(person_ref, joint_ref, mask_ref, out_ref, *, time, n_feat,
               inv_keep_prob):
    # person_ref: (E, 1)    person.T (every feature column shares it)
    # joint_ref : (E, F)    tile(joint, (n_dim, 1)).T, pre-tiled in the wrapper
    # mask_ref  : (E, F*T)  {0., 1.} dropout keep mask, already lane-dense
    # out_ref   : (E, F*T)  row-major flattening of the torch (E, F, T) output
    #
    # Fold the dropout scale into the tiny (E, F) tensor (perf review), so the
    # only full-size op is one VPU multiply by the mask.
    p = (person_ref[...] + joint_ref[...]) * jnp.float32(inv_keep_prob)  # (E, F)

    e, ft = out_ref.shape
    lane = jax.lax.broadcasted_iota(jnp.int32, (e, ft), 1)

    # Expand p along the lane axis: output lane j in [f*T, (f+1)*T) takes p[:, f].
    # Static unrolled band-select: pure VPU compares/selects + lane broadcasts,
    # exact, no reshape / gather / cross-tile relayout.  F is tiny (12).
    val = jnp.zeros((e, ft), jnp.float32)
    for f in range(n_feat):
        band = (lane >= f * time) & (lane < (f + 1) * time)
        val = jnp.where(band, p[:, f:f + 1], val)

    out_ref[...] = val * mask_ref[...]


def _pe_pallas(person_t, joint_t, mask01, *, time, inv_keep_prob):
    """person_t: (E, 1); joint_t: (E, F); mask01: (E, F*time) in {0., 1.}."""
    E, F = joint_t.shape
    FT = F * time
    kernel = functools.partial(_pe_kernel, time=int(time), n_feat=int(F),
                               inv_keep_prob=float(inv_keep_prob))
    # Toy sizes: a single program with whole arrays resident in VMEM.
    # TODO(synk): for large `time`, add a grid over a lane-dense T axis
    # (T blocks multiple of 128, dimension_semantics=("parallel",)).
    out2d = pl.pallas_call(
        kernel,
        out_shape=jax.ShapeDtypeStruct((E, FT), jnp.float32),
        in_specs=[
            pl.BlockSpec(memory_space=pltpu.MemorySpace.VMEM),  # person_t (E, 1)
            pl.BlockSpec(memory_space=pltpu.MemorySpace.VMEM),  # joint_t  (E, F)
            pl.BlockSpec(memory_space=pltpu.MemorySpace.VMEM),  # mask01   (E, F*T)
        ],
        out_specs=pl.BlockSpec(memory_space=pltpu.MemorySpace.VMEM),
    )(person_t, joint_t, mask01)
    # (E, F*T) row-major == (E, F, T): this reshape is free.
    return out2d.reshape(E, F, time)


def positional_embedding_ref(person, joint, *, time, n_dim=3):
    """Pure-JAX transcription of the torch forward (dropout disabled)."""
    F = n_dim * joint.shape[0]
    p_person = jnp.repeat(person, F, axis=0)   # repeat_interleave(feature, dim=0)
    p_joint = jnp.tile(joint, (n_dim, 1))      # joint.repeat(3, 1)
    p = p_person + p_joint                     # (F, E)
    p = p[None]                                # (1, F, E)
    p = jnp.transpose(p, (2, 1, 0))            # transpose(2, 0) -> (E, F, 1)
    return jnp.tile(p, (1, 1, time))           # repeat(1, 1, time)


def positional_embedding(person, joint, *, time, n_dim=3, p_drop=0.1,
                         training=True, key=None):
    """person: (1, E) f32; joint: (J, E) f32. Returns (E, n_dim*J, time) f32."""
    person = person.astype(jnp.float32)
    joint = joint.astype(jnp.float32)
    J, E = joint.shape
    F = n_dim * J

    if (not training) or p_drop == 0.0:
        # Eval path: a tiny broadcast -- cheaper to let XLA fuse into the
        # consumer than to pay a Pallas launch (perf review).
        return positional_embedding_ref(person, joint, time=time, n_dim=n_dim)

    if p_drop >= 1.0:
        if p_drop == 1.0:        # torch: everything dropped
            return jnp.zeros((E, F, time), jnp.float32)
        raise ValueError(f"invalid dropout probability {p_drop}")
    if key is None:
        raise ValueError("training-mode dropout requires a fresh jax.random key "
                         "per call (otherwise the mask repeats every step)")

    # TODO(synk): torch's dropout RNG stream cannot be reproduced bit-for-bit;
    # the mask is drawn with jax.random in the wrapper (pltpu.prng_* avoided --
    # it has no interpret/cpu lowering) directly in the lane-dense layout.
    keep = jax.random.bernoulli(key, 1.0 - p_drop, (E, F * time))
    mask01 = keep.astype(jnp.float32)

    person_t = person.T                        # (E, 1)
    joint_t = jnp.tile(joint, (n_dim, 1)).T    # (E, F)  pre-tiled layout plumbing
    return _pe_pallas(person_t, joint_t, mask01, time=time,
                      inv_keep_prob=1.0 / (1.0 - p_drop))


if __name__ == "__main__":
    # Small shapes consistent with the module: opt.in_features=12 -> J=4,
    # embed_size=32, mid_feature ("time")=16, idx (mean of person init)=1.0.
    in_features = 12
    embed_size = 32
    mid_feature = 16
    n_dim = 3
    J = in_features // n_dim
    idx = 1.0
    p_drop = 0.1

    key = jax.random.PRNGKey(0)
    kj, kp, kd = jax.random.split(key, 3)
    # Deterministic stand-ins for the in-forward torch.nn.init.normal_ calls.
    joint = 0.02 * jax.random.normal(kj, (J, embed_size), dtype=jnp.float32)
    person = idx + 0.02 * jax.random.normal(kp, (1, embed_size), dtype=jnp.float32)

    base = positional_embedding_ref(person, joint, time=mid_feature, n_dim=n_dim)

    # 1) Kernel with an all-ones mask (no dropout) must equal the reference.
    ones_mask = jnp.ones((embed_size, in_features * mid_feature), jnp.float32)
    out_nodrop = _pe_pallas(person.T, jnp.tile(joint, (n_dim, 1)).T, ones_mask,
                            time=mid_feature, inv_keep_prob=1.0)
    out_nodrop = jax.block_until_ready(out_nodrop)
    assert out_nodrop.shape == (embed_size, in_features, mid_feature)
    assert jnp.allclose(out_nodrop, base, atol=1e-6), "kernel (no dropout) != ref"

    # 2) Training path (kernel + dropout) vs. reference masked with the same draw.
    out_train = positional_embedding(person, joint, time=mid_feature, n_dim=n_dim,
                                     p_drop=p_drop, training=True, key=kd)
    out_train = jax.block_until_ready(out_train)
    keep = jax.random.bernoulli(kd, 1.0 - p_drop,
                                (embed_size, in_features * mid_feature))
    keep = keep.reshape(embed_size, in_features, mid_feature)
    ref_train = jnp.where(keep, base * (1.0 / (1.0 - p_drop)), 0.0)
    assert out_train.shape == (embed_size, in_features, mid_feature)
    assert jnp.allclose(out_train, ref_train, atol=1e-6), "kernel (dropout) != ref"

    # 3) Eval mode bypasses Pallas and equals the plain broadcast.
    out_eval = jax.block_until_ready(
        positional_embedding(person, joint, time=mid_feature, n_dim=n_dim,
                             p_drop=p_drop, training=False))
    assert jnp.allclose(out_eval, base, atol=1e-6)

    print("KERNEL_OK")
</pallas_src>

<mosaic_0001>
module attributes {stable_mosaic.version = 11 : i64} {
  func.func @_pe_kernel(%arg0: memref<32x1xf32, #tpu.memory_space<vmem>>, %arg1: memref<32x12xf32, #tpu.memory_space<vmem>>, %arg2: memref<32x192xf32, #tpu.memory_space<vmem>>, %arg3: memref<32x192xf32, #tpu.memory_space<vmem>>) attributes {dimension_semantics = [], scalar_prefetch = 0 : i64, scratch_operands = 0 : i64, tpu.core_type = #tpu.core_type<tc>} {
    %c0 = arith.constant 0 : index
    %c0_0 = arith.constant 0 : index
    %0 = vector.load %arg0[%c0, %c0_0] : memref<32x1xf32, #tpu.memory_space<vmem>>, vector<32x1xf32>
    %c0_1 = arith.constant 0 : index
    %c0_2 = arith.constant 0 : index
    %1 = vector.load %arg1[%c0_1, %c0_2] : memref<32x12xf32, #tpu.memory_space<vmem>>, vector<32x12xf32>
    %2 = vector.broadcast %0 : vector<32x1xf32> to vector<32x12xf32>
    %3 = arith.addf %2, %1 : vector<32x12xf32>
    %cst = arith.constant 1.000000e+00 : f32
    %4 = vector.broadcast %cst : f32 to vector<32x12xf32>
    %5 = arith.mulf %3, %4 : vector<32x12xf32>
    %6 = tpu.iota {dimensions = array<i32: 1>} : vector<32x192xi32>
    %cst_3 = arith.constant 0.000000e+00 : f32
    %7 = vector.broadcast %cst_3 : f32 to vector<32x192xf32>
    %c0_i32 = arith.constant 0 : i32
    %8 = vector.broadcast %c0_i32 : i32 to vector<32x192xi32>
    %9 = arith.cmpi sge, %6, %8 : vector<32x192xi32>
    %c16_i32 = arith.constant 16 : i32
    %10 = vector.broadcast %c16_i32 : i32 to vector<32x192xi32>
    %11 = arith.cmpi slt, %6, %10 : vector<32x192xi32>
    %12 = arith.andi %9, %11 : vector<32x192xi1>
    %13 = vector.extract_strided_slice %5 {offsets = [0, 0], sizes = [32, 1], strides = [1, 1]} : vector<32x12xf32> to vector<32x1xf32>
    %14 = vector.shape_cast %13 : vector<32x1xf32> to vector<32x1xf32>
    %15 = vector.broadcast %14 : vector<32x1xf32> to vector<32x192xf32>
    %16 = arith.select %12, %15, %7 : vector<32x192xi1>, vector<32x192xf32>
    %c16_i32_4 = arith.constant 16 : i32
    %17 = vector.broadcast %c16_i32_4 : i32 to vector<32x192xi32>
    %18 = arith.cmpi sge, %6, %17 : vector<32x192xi32>
    %c32_i32 = arith.constant 32 : i32
    %19 = vector.broadcast %c32_i32 : i32 to vector<32x192xi32>
    %20 = arith.cmpi slt, %6, %19 : vector<32x192xi32>
    %21 = arith.andi %18, %20 : vector<32x192xi1>
    %22 = vector.extract_strided_slice %5 {offsets = [0, 1], sizes = [32, 1], strides = [1, 1]} : vector<32x12xf32> to vector<32x1xf32>
    %23 = vector.shape_cast %22 : vector<32x1xf32> to vector<32x1xf32>
    %24 = vector.broadcast %23 : vector<32x1xf32> to vector<32x192xf32>
    %25 = arith.select %21, %24, %16 : vector<32x192xi1>, vector<32x192xf32>
    %c32_i32_5 = arith.constant 32 : i32
    %26 = vector.broadcast %c32_i32_5 : i32 to vector<32x192xi32>
    %27 = arith.cmpi sge, %6, %26 : vector<32x192xi32>
    %c48_i32 = arith.constant 48 : i32
    %28 = vector.broadcast %c48_i32 : i32 to vector<32x192xi32>
    %29 = arith.cmpi slt, %6, %28 : vector<32x192xi32>
    %30 = arith.andi %27, %29 : vector<32x192xi1>
    %31 = vector.extract_strided_slice %5 {offsets = [0, 2], sizes = [32, 1], strides = [1, 1]} : vector<32x12xf32> to vector<32x1xf32>
    %32 = vector.shape_cast %31 : vector<32x1xf32> to vector<32x1xf32>
    %33 = vector.broadcast %32 : vector<32x1xf32> to vector<32x192xf32>
    %34 = arith.select %30, %33, %25 : vector<32x192xi1>, vector<32x192xf32>
    %c48_i32_6 = arith.constant 48 : i32
    %35 = vector.broadcast %c48_i32_6 : i32 to vector<32x192xi32>
    %36 = arith.cmpi sge, %6, %35 : vector<32x192xi32>
    %c64_i32 = arith.constant 64 : i32
    %37 = vector.broadcast %c64_i32 : i32 to vector<32x192xi32>
    %38 = arith.cmpi slt, %6, %37 : vector<32x192xi32>
    %39 = arith.andi %36, %38 : vector<32x192xi1>
    %40 = vector.extract_strided_slice %5 {offsets = [0, 3], sizes = [32, 1], strides = [1, 1]} : vector<32x12xf32> to vector<32x1xf32>
    %41 = vector.shape_cast %40 : vector<32x1xf32> to vector<32x1xf32>
    %42 = vector.broadcast %41 : vector<32x1xf32> to vector<32x192xf32>
    %43 = arith.select %39, %42, %34 : vector<32x192xi1>, vector<32x192xf32>
    %c64_i32_7 = arith.constant 64 : i32
    %44 = vector.broadcast %c64_i32_7 : i32 to vector<32x192xi32>
    %45 = arith.cmpi sge, %6, %44 : vector<32x192xi32>
    %c80_i32 = arith.constant 80 : i32
    %46 = vector.broadcast %c80_i32 : i32 to vector<32x192xi32>
    %47 = arith.cmpi slt, %6, %46 : vector<32x192xi32>
    %48 = arith.andi %45, %47 : vector<32x192xi1>
    %49 = vector.extract_strided_slice %5 {offsets = [0, 4], sizes = [32, 1], strides = [1, 1]} : vector<32x12xf32> to vector<32x1xf32>
    %50 = vector.shape_cast %49 : vector<32x1xf32> to vector<32x1xf32>
    %51 = vector.broadcast %50 : vector<32x1xf32> to vector<32x192xf32>
    %52 = arith.select %48, %51, %43 : vector<32x192xi1>, vector<32x192xf32>
    %c80_i32_8 = arith.constant 80 : i32
    %53 = vector.broadcast %c80_i32_8 : i32 to vector<32x192xi32>
    %54 = arith.cmpi sge, %6, %53 : vector<32x192xi32>
    %c96_i32 = arith.constant 96 : i32
    %55 = vector.broadcast %c96_i32 : i32 to vector<32x192xi32>
    %56 = arith.cmpi slt, %6, %55 : vector<32x192xi32>
    %57 = arith.andi %54, %56 : vector<32x192xi1>
    %58 = vector.extract_strided_slice %5 {offsets = [0, 5], sizes = [32, 1], strides = [1, 1]} : vector<32x12xf32> to vector<32x1xf32>
    %59 = vector.shape_cast %58 : vector<32x1xf32> to vector<32x1xf32>
    %60 = vector.broadcast %59 : vector<32x1xf32> to vector<32x192xf32>
    %61 = arith.select %57, %60, %52 : vector<32x192xi1>, vector<32x192xf32>
    %c96_i32_9 = arith.constant 96 : i32
    %62 = vector.broadcast %c96_i32_9 : i32 to vector<32x192xi32>
    %63 = arith.cmpi sge, %6, %62 : vector<32x192xi32>
    %c112_i32 = arith.constant 112 : i32
    %64 = vector.broadcast %c112_i32 : i32 to vector<32x192xi32>
    %65 = arith.cmpi slt, %6, %64 : vector<32x192xi32>
    %66 = arith.andi %63, %65 : vector<32x192xi1>
    %67 = vector.extract_strided_slice %5 {offsets = [0, 6], sizes = [32, 1], strides = [1, 1]} : vector<32x12xf32> to vector<32x1xf32>
    %68 = vector.shape_cast %67 : vector<32x1xf32> to vector<32x1xf32>
    %69 = vector.broadcast %68 : vector<32x1xf32> to vector<32x192xf32>
    %70 = arith.select %66, %69, %61 : vector<32x192xi1>, vector<32x192xf32>
    %c112_i32_10 = arith.constant 112 : i32
    %71 = vector.broadcast %c112_i32_10 : i32 to vector<32x192xi32>
    %72 = arith.cmpi sge, %6, %71 : vector<32x192xi32>
    %c128_i32 = arith.constant 128 : i32
    %73 = vector.broadcast %c128_i32 : i32 to vector<32x192xi32>
    %74 = arith.cmpi slt, %6, %73 : vector<32x192xi32>
    %75 = arith.andi %72, %74 : vector<32x192xi1>
    %76 = vector.extract_strided_slice %5 {offsets = [0, 7], sizes = [32, 1], strides = [1, 1]} : vector<32x12xf32> to vector<32x1xf32>
    %77 = vector.shape_cast %76 : vector<32x1xf32> to vector<32x1xf32>
    %78 = vector.broadcast %77 : vector<32x1xf32> to vector<32x192xf32>
    %79 = arith.select %75, %78, %70 : vector<32x192xi1>, vector<32x192xf32>
    %c128_i32_11 = arith.constant 128 : i32
    %80 = vector.broadcast %c128_i32_11 : i32 to vector<32x192xi32>
    %81 = arith.cmpi sge, %6, %80 : vector<32x192xi32>
    %c144_i32 = arith.constant 144 : i32
    %82 = vector.broadcast %c144_i32 : i32 to vector<32x192xi32>
    %83 = arith.cmpi slt, %6, %82 : vector<32x192xi32>
    %84 = arith.andi %81, %83 : vector<32x192xi1>
    %85 = vector.extract_strided_slice %5 {offsets = [0, 8], sizes = [32, 1], strides = [1, 1]} : vector<32x12xf32> to vector<32x1xf32>
    %86 = vector.shape_cast %85 : vector<32x1xf32> to vector<32x1xf32>
    %87 = vector.broadcast %86 : vector<32x1xf32> to vector<32x192xf32>
    %88 = arith.select %84, %87, %79 : vector<32x192xi1>, vector<32x192xf32>
    %c144_i32_12 = arith.constant 144 : i32
    %89 = vector.broadcast %c144_i32_12 : i32 to vector<32x192xi32>
    %90 = arith.cmpi sge, %6, %89 : vector<32x192xi32>
    %c160_i32 = arith.constant 160 : i32
    %91 = vector.broadcast %c160_i32 : i32 to vector<32x192xi32>
    %92 = arith.cmpi slt, %6, %91 : vector<32x192xi32>
    %93 = arith.andi %90, %92 : vector<32x192xi1>
    %94 = vector.extract_strided_slice %5 {offsets = [0, 9], sizes = [32, 1], strides = [1, 1]} : vector<32x12xf32> to vector<32x1xf32>
    %95 = vector.shape_cast %94 : vector<32x1xf32> to vector<32x1xf32>
    %96 = vector.broadcast %95 : vector<32x1xf32> to vector<32x192xf32>
    %97 = arith.select %93, %96, %88 : vector<32x192xi1>, vector<32x192xf32>
    %c160_i32_13 = arith.constant 160 : i32
    %98 = vector.broadcast %c160_i32_13 : i32 to vector<32x192xi32>
    %99 = arith.cmpi sge, %6, %98 : vector<32x192xi32>
    %c176_i32 = arith.constant 176 : i32
    %100 = vector.broadcast %c176_i32 : i32 to vector<32x192xi32>
    %101 = arith.cmpi slt, %6, %100 : vector<32x192xi32>
    %102 = arith.andi %99, %101 : vector<32x192xi1>
    %103 = vector.extract_strided_slice %5 {offsets = [0, 10], sizes = [32, 1], strides = [1, 1]} : vector<32x12xf32> to vector<32x1xf32>
    %104 = vector.shape_cast %103 : vector<32x1xf32> to vector<32x1xf32>
    %105 = vector.broadcast %104 : vector<32x1xf32> to vector<32x192xf32>
    %106 = arith.select %102, %105, %97 : vector<32x192xi1>, vector<32x192xf32>
    %c176_i32_14 = arith.constant 176 : i32
    %107 = vector.broadcast %c176_i32_14 : i32 to vector<32x192xi32>
    %108 = arith.cmpi sge, %6, %107 : vector<32x192xi32>
    %c192_i32 = arith.constant 192 : i32
    %109 = vector.broadcast %c192_i32 : i32 to vector<32x192xi32>
    %110 = arith.cmpi slt, %6, %109 : vector<32x192xi32>
    %111 = arith.andi %108, %110 : vector<32x192xi1>
    %112 = vector.extract_strided_slice %5 {offsets = [0, 11], sizes = [32, 1], strides = [1, 1]} : vector<32x12xf32> to vector<32x1xf32>
    %113 = vector.shape_cast %112 : vector<32x1xf32> to vector<32x1xf32>
    %114 = vector.broadcast %113 : vector<32x1xf32> to vector<32x192xf32>
    %115 = arith.select %111, %114, %106 : vector<32x192xi1>, vector<32x192xf32>
    %c0_15 = arith.constant 0 : index
    %c0_16 = arith.constant 0 : index
    %116 = vector.load %arg2[%c0_15, %c0_16] : memref<32x192xf32, #tpu.memory_space<vmem>>, vector<32x192xf32>
    %117 = arith.mulf %115, %116 : vector<32x192xf32>
    %c0_17 = arith.constant 0 : index
    %c0_18 = arith.constant 0 : index
    %118 = vector.load %arg3[%c0_17, %c0_18] : memref<32x192xf32, #tpu.memory_space<vmem>>, vector<32x192xf32>
    tpu.vector_store %arg3[%c0_17, %c0_18], %117 {strides = array<i32>} : memref<32x192xf32, #tpu.memory_space<vmem>>, vector<32x192xf32>,
    return
  }
}

</mosaic_0001>

<llo_original>
// kernel: tpu_custom_call.1
$region0: #{tpu_custom_call.1}
  #allocation0 [shape = 'u32[]', space=smem, size = 0x4, offset = 0x4, fixed_abs, tag = 'smem constant byte address 0x4 - core index']
  #allocation1 [shape = 'u32[144,128]{1,0:T(1,128)}', space=vmem, size = 0x12000, scoped, tag = 'internal scratch']
  %s0 = inlined_call_operand.vmem [shape: f32[32,1], index: 0, kind: input, shape index: {}]
  %s1 = inlined_call_operand.vmem [shape: f32[32,12], index: 1, kind: input, shape index: {}]
  %s2 = inlined_call_operand.vmem [shape: f32[32,192], index: 2, kind: input, shape index: {}]
  %s3 = inlined_call_operand.hbm [shape: f32[32,192], index: 3, kind: output, shape index: {}]
  %s4 = sld [smem:[#allocation0]]
  $region22: #{tpu_custom_call.1} parent=0
    _
  %s6 = ssub.s32 1, %s4
  %s7 = scalar_select 0, %s6, %s4
  $region1: #{tpu_custom_call.1} parent=0
    #allocation2 [shape = 'u8[32768]{0}', space=vmem, size = 0x8000, scoped, tag = 'output window, operand 0, single buffered']
    #allocation3 [shape = 's32[1]{0}', space=sflag, size = 0x4, scoped, tag = 'scoped memory for tpu_custom_call.1']
    %8 = vsyncpa [#allocation3], 0
    // Predicated region
    $region2: #{tpu_custom_call.1} parent=1 // pred_check
      _
    $region3: #{tpu_custom_call.1} parent=1 // pred_check_branch
      %10 = sbr.rel (0) target = $region5
    $region4: #{tpu_custom_call.1} parent=1 // pred_region
      _
    $region5: #{tpu_custom_call.1} parent=1 // pred_fallthru
      _
    // Predicated region
    $region6: #{tpu_custom_call.1} parent=1 // pred_check
      _
    $region7: #{tpu_custom_call.1} parent=1 // pred_check_branch
      %12 = sbr.rel (0) target = $region9
    $region8: #{tpu_custom_call.1} parent=1 // pred_region
      _
    $region9: #{tpu_custom_call.1} parent=1 // pred_fallthru
      _
    // Predicated region
    $region10: #{tpu_custom_call.1} parent=1 // pred_check
      _
    $region11: #{tpu_custom_call.1} parent=1 // pred_check_branch
      %14 = sbr.rel (0) target = $region13
    $region12: #{tpu_custom_call.1} parent=1 // pred_region
      _
    $region13: #{tpu_custom_call.1} parent=1 // pred_fallthru
      _
    %v15 = vld [vmem:[%s0] sm:$0xff]
    %v16 = vld [vmem:[%s0 + $0x8] sm:$0xff]
    %v17 = vld [vmem:[%s0 + $0x10] sm:$0xff]
    %v18 = vld [vmem:[%s0 + $0x18] sm:$0xff]
    %v19 = vld [vmem:[%s1] sm:$0xff]
    %v20 = vld [vmem:[%s1 + $0x8] sm:$0xff]
    %v21 = vld [vmem:[%s1 + $0x10] sm:$0xff]
    %v22 = vld [vmem:[%s1 + $0x18] sm:$0xff]
    %24 = vset.pattern.permute.xlu0 0
    %25 = vperm.xlu0 %24, %v15
    %v26 = vpop.permute.xlu0 %25
    %29 = vset.pattern.permute.xlu0 0
    %30 = vperm.xlu0 %29, %v16
    %v31 = vpop.permute.xlu0 %30
    %34 = vset.pattern.permute.xlu0 0
    %35 = vperm.xlu0 %34, %v17
    %v36 = vpop.permute.xlu0 %35
    %39 = vset.pattern.permute.xlu0 0
    %40 = vperm.xlu0 %39, %v18
    %v41 = vpop.permute.xlu0 %40
    %v43 = vadd.f32 %v26, %v19
    %v44 = vadd.f32 %v31, %v20
    %v45 = vadd.f32 %v36, %v21
    %v46 = vadd.f32 %v41, %v22
    %v47 = vlaneseq
    %v48 = vand.u32 %v47, 127
    %v49 = vadd.s32 %v48, 128
    %vm50 = vcmp.ge.s32.totalorder %v48, 0
    %vm51 = vcmp.ge.s32.totalorder %v49, 0
    %vm52 = vcmp.lt.s32.totalorder %v48, 16
    %vm53 = vcmp.lt.s32.totalorder %v49, 16
    %vm54 = vmand %vm50, %vm52
    %vm55 = vmand %vm51, %vm53
    %57 = vset.pattern.permute.xlu0 0
    %58 = vperm.xlu0 %57, %v43
    %v59 = vpop.permute.xlu0 %58
    %62 = vset.pattern.permute.xlu0 0
    %63 = vperm.xlu0 %62, %v44
    %v64 = vpop.permute.xlu0 %63
    %67 = vset.pattern.permute.xlu0 0
    %68 = vperm.xlu0 %67, %v45
    %v69 = vpop.permute.xlu0 %68
    %72 = vset.pattern.permute.xlu0 0
    %73 = vperm.xlu0 %72, %v46
    %v74 = vpop.permute.xlu0 %73
    %v76 = vsel %vm54, %v59, 0.0
    %v77 = vsel %vm55, %v59, 0.0
    %v78 = vsel %vm54, %v64, 0.0
    %v79 = vsel %vm55, %v64, 0.0
    %v80 = vsel %vm54, %v69, 0.0
    %v81 = vsel %vm55, %v69, 0.0
    %v82 = vsel %vm54, %v74, 0.0
    %v83 = vsel %vm55, %v74, 0.0
    %vm84 = vcmp.ge.s32.totalorder %v48, 16
    %vm85 = vcmp.ge.s32.totalorder %v49, 16
    %vm86 = vcmp.lt.s32.totalorder %v48, 32
    %vm87 = vcmp.lt.s32.totalorder %v49, 32
    %vm88 = vmand %vm84, %vm86
    %vm89 = vmand %vm85, %vm87
    %90 = vset.pattern.permute.xlu0 1
    %91 = vperm.xlu0 %90, %v43
    %v92 = vpop.permute.xlu0 %91
    %94 = vset.pattern.permute.xlu0 1
    %95 = vperm.xlu0 %94, %v44
    %v96 = vpop.permute.xlu0 %95
    %98 = vset.pattern.permute.xlu0 1
    %99 = vperm.xlu0 %98, %v45
    %v100 = vpop.permute.xlu0 %99
    %102 = vset.pattern.permute.xlu0 1
    %103 = vperm.xlu0 %102, %v46
    %v104 = vpop.permute.xlu0 %103
    %v106 = vsel %vm88, %v92, %v76
    %v107 = vsel %vm89, %v92, %v77
    %v108 = vsel %vm88, %v96, %v78
    %v109 = vsel %vm89, %v96, %v79
    %v110 = vsel %vm88, %v100, %v80
    %v111 = vsel %vm89, %v100, %v81
    %v112 = vsel %vm88, %v104, %v82
    %v113 = vsel %vm89, %v104, %v83
    %vm114 = vcmp.ge.s32.totalorder %v48, 32
    %vm115 = vcmp.ge.s32.totalorder %v49, 32
    %vm116 = vcmp.lt.s32.totalorder %v48, 48
    %vm117 = vcmp.lt.s32.totalorder %v49, 48
    %vm118 = vmand %vm114, %vm116
    %vm119 = vmand %vm115, %vm117
    %120 = vset.pattern.permute.xlu0 2
    %121 = vperm.xlu0 %120, %v43
    %v122 = vpop.permute.xlu0 %121
    %124 = vset.pattern.permute.xlu0 2
    %125 = vperm.xlu0 %124, %v44
    %v126 = vpop.permute.xlu0 %125
    %128 = vset.pattern.permute.xlu0 2
    %129 = vperm.xlu0 %128, %v45
    %v130 = vpop.permute.xlu0 %129
    %132 = vset.pattern.permute.xlu0 2
    %133 = vperm.xlu0 %132, %v46
    %v134 = vpop.permute.xlu0 %133
    %v136 = vsel %vm118, %v122, %v106
    %v137 = vsel %vm119, %v122, %v107
    %v138 = vsel %vm118, %v126, %v108
    %v139 = vsel %vm119, %v126, %v109
    %v140 = vsel %vm118, %v130, %v110
    %v141 = vsel %vm119, %v130, %v111
    %v142 = vsel %vm118, %v134, %v112
    %v143 = vsel %vm119, %v134, %v113
    %vm144 = vcmp.ge.s32.totalorder %v48, 48
    %vm145 = vcmp.ge.s32.totalorder %v49, 48
    %vm146 = vcmp.lt.s32.totalorder %v48, 64
    %vm147 = vcmp.lt.s32.totalorder %v49, 64
    %vm148 = vmand %vm144, %vm146
    %vm149 = vmand %vm145, %vm147
    %150 = vset.pattern.permute.xlu0 3
    %151 = vperm.xlu0 %150, %v43
    %v152 = vpop.permute.xlu0 %151
    %154 = vset.pattern.permute.xlu0 3
    %155 = vperm.xlu0 %154, %v44
    %v156 = vpop.permute.xlu0 %155
    %158 = vset.pattern.permute.xlu0 3
    %159 = vperm.xlu0 %158, %v45
    %v160 = vpop.permute.xlu0 %159
    %162 = vset.pattern.permute.xlu0 3
    %163 = vperm.xlu0 %162, %v46
    %v164 = vpop.permute.xlu0 %163
    %v166 = vsel %vm148, %v152, %v136
    %v167 = vsel %vm149, %v152, %v137
    %v168 = vsel %vm148, %v156, %v138
    %v169 = vsel %vm149, %v156, %v139
    %v170 = vsel %vm148, %v160, %v140
    %v171 = vsel %vm149, %v160, %v141
    %v172 = vsel %vm148, %v164, %v142
    %v173 = vsel %vm149, %v164, %v143
    %vm174 = vcmp.ge.s32.totalorder %v48, 64
    %vm175 = vcmp.ge.s32.totalorder %v49, 64
    %vm176 = vcmp.lt.s32.totalorder %v48, 80
    %vm177 = vcmp.lt.s32.totalorder %v49, 80
    %vm178 = vmand %vm174, %vm176
    %vm179 = vmand %vm175, %vm177
    %180 = vset.pattern.permute.xlu0 4
    %181 = vperm.xlu0 %180, %v43
    %v182 = vpop.permute.xlu0 %181
    %184 = vset.pattern.permute.xlu0 4
    %185 = vperm.xlu0 %184, %v44
    %v186 = vpop.permute.xlu0 %185
    %188 = vset.pattern.permute.xlu0 4
    %189 = vperm.xlu0 %188, %v45
    %v190 = vpop.permute.xlu0 %189
    %192 = vset.pattern.permute.xlu0 4
    %193 = vperm.xlu0 %192, %v46
    %v194 = vpop.permute.xlu0 %193
    %v196 = vsel %vm178, %v182, %v166
    %v197 = vsel %vm179, %v182, %v167
    %v198 = vsel %vm178, %v186, %v168
    %v199 = vsel %vm179, %v186, %v169
    %v200 = vsel %vm178, %v190, %v170
    %v201 = vsel %vm179, %v190, %v171
    %v202 = vsel %vm178, %v194, %v172
    %v203 = vsel %vm179, %v194, %v173
    %vm204 = vcmp.ge.s32.totalorder %v48, 80
    %vm205 = vcmp.ge.s32.totalorder %v49, 80
    %vm206 = vcmp.lt.s32.totalorder %v48, 96
    %vm207 = vcmp.lt.s32.totalorder %v49, 96
    %vm208 = vmand %vm204, %vm206
    %vm209 = vmand %vm205, %vm207
    %210 = vset.pattern.permute.xlu0 5
    %211 = vperm.xlu0 %210, %v43
    %v212 = vpop.permute.xlu0 %211
    %214 = vset.pattern.permute.xlu0 5
    %215 = vperm.xlu0 %214, %v44
    %v216 = vpop.permute.xlu0 %215
    %218 = vset.pattern.permute.xlu0 5
    %219 = vperm.xlu0 %218, %v45
    %v220 = vpop.permute.xlu0 %219
    %222 = vset.pattern.permute.xlu0 5
    %223 = vperm.xlu0 %222, %v46
    %v224 = vpop.permute.xlu0 %223
    %v226 = vsel %vm208, %v212, %v196
    %v227 = vsel %vm209, %v212, %v197
    %v228 = vsel %vm208, %v216, %v198
    %v229 = vsel %vm209, %v216, %v199
    %v230 = vsel %vm208, %v220, %v200
    %v231 = vsel %vm209, %v220, %v201
    %v232 = vsel %vm208, %v224, %v202
    %v233 = vsel %vm209, %v224, %v203
    %vm234 = vcmp.ge.s32.totalorder %v48, 96
    %vm235 = vcmp.ge.s32.totalorder %v49, 96
    %vm236 = vcmp.lt.s32.totalorder %v48, 112
    %vm237 = vcmp.lt.s32.totalorder %v49, 112
    %vm238 = vmand %vm234, %vm236
    %vm239 = vmand %vm235, %vm237
    %240 = vset.pattern.permute.xlu0 6
    %241 = vperm.xlu0 %240, %v43
    %v242 = vpop.permute.xlu0 %241
    %244 = vset.pattern.permute.xlu0 6
    %245 = vperm.xlu0 %244, %v44
    %v246 = vpop.permute.xlu0 %245
    %248 = vset.pattern.permute.xlu0 6
    %249 = vperm.xlu0 %248, %v45
    %v250 = vpop.permute.xlu0 %249
    %252 = vset.pattern.permute.xlu0 6
    %253 = vperm.xlu0 %252, %v46
    %v254 = vpop.permute.xlu0 %253
    %v256 = vsel %vm238, %v242, %v226
    %v257 = vsel %vm239, %v242, %v227
    %v258 = vsel %vm238, %v246, %v228
    %v259 = vsel %vm239, %v246, %v229
    %v260 = vsel %vm238, %v250, %v230
    %v261 = vsel %vm239, %v250, %v231
    %v262 = vsel %vm238, %v254, %v232
    %v263 = vsel %vm239, %v254, %v233
    %vm264 = vcmp.ge.s32.totalorder %v48, 112
    %vm265 = vcmp.ge.s32.totalorder %v49, 112
    %vm266 = vcmp.lt.s32.totalorder %v48, 128
    %vm267 = vcmp.lt.s32.totalorder %v49, 128
    %vm268 = vmand %vm264, %vm266
    %vm269 = vmand %vm265, %vm267
    %270 = vset.pattern.permute.xlu0 7
    %271 = vperm.xlu0 %270, %v43
    %v272 = vpop.permute.xlu0 %271
    %274 = vset.pattern.permute.xlu0 7
    %275 = vperm.xlu0 %274, %v44
    %v276 = vpop.permute.xlu0 %275
    %278 = vset.pattern.permute.xlu0 7
    %279 = vperm.xlu0 %278, %v45
    %v280 = vpop.permute.xlu0 %279
    %282 = vset.pattern.permute.xlu0 7
    %283 = vperm.xlu0 %282, %v46
    %v284 = vpop.permute.xlu0 %283
    %v286 = vsel %vm268, %v272, %v256
    %v287 = vsel %vm269, %v272, %v257
    %v288 = vsel %vm268, %v276, %v258
    %v289 = vsel %vm269, %v276, %v259
    %v290 = vsel %vm268, %v280, %v260
    %v291 = vsel %vm269, %v280, %v261
    %v292 = vsel %vm268, %v284, %v262
    %v293 = vsel %vm269, %v284, %v263
    %vm294 = vcmp.ge.s32.totalorder %v48, 128
    %vm295 = vcmp.ge.s32.totalorder %v49, 128
    %vm296 = vcmp.lt.s32.totalorder %v48, 144
    %vm297 = vcmp.lt.s32.totalorder %v49, 144
    %vm298 = vmand %vm294, %vm296
    %vm299 = vmand %vm295, %vm297
    %300 = vset.pattern.permute.xlu0 8
    %301 = vperm.xlu0 %300, %v43
    %v302 = vpop.permute.xlu0 %301
    %304 = vset.pattern.permute.xlu0 8
    %305 = vperm.xlu0 %304, %v44
    %v306 = vpop.permute.xlu0 %305
    %308 = vset.pattern.permute.xlu0 8
    %309 = vperm.xlu0 %308, %v45
    %v310 = vpop.permute.xlu0 %309
    %312 = vset.pattern.permute.xlu0 8
    %313 = vperm.xlu0 %312, %v46
    %v314 = vpop.permute.xlu0 %313
    %v316 = vsel %vm298, %v302, %v286
    %v317 = vsel %vm299, %v302, %v287
    %v318 = vsel %vm298, %v306, %v288
    %v319 = vsel %vm299, %v306, %v289
    %v320 = vsel %vm298, %v310, %v290
    %v321 = vsel %vm299, %v310, %v291
    %v322 = vsel %vm298, %v314, %v292
    %v323 = vsel %vm299, %v314, %v293
    %vm324 = vcmp.ge.s32.totalorder %v48, 144
    %vm325 = vcmp.ge.s32.totalorder %v49, 144
    %vm326 = vcmp.lt.s32.totalorder %v48, 160
    %vm327 = vcmp.lt.s32.totalorder %v49, 160
    %vm328 = vmand %vm324, %vm326
    %vm329 = vmand %vm325, %vm327
    %330 = vset.pattern.permute.xlu0 9
    %331 = vperm.xlu0 %330, %v43
    %v332 = vpop.permute.xlu0 %331
    %334 = vset.pattern.permute.xlu0 9
    %335 = vperm.xlu0 %334, %v44
    %v336 = vpop.permute.xlu0 %335
    %338 = vset.pattern.permute.xlu0 9
    %339 = vperm.xlu0 %338, %v45
    %v340 = vpop.permute.xlu0 %339
    %342 = vset.pattern.permute.xlu0 9
    %343 = vperm.xlu0 %342, %v46
    %v344 = vpop.permute.xlu0 %343
    %v346 = vsel %vm328, %v332, %v316
    %v347 = vsel %vm329, %v332, %v317
    %v348 = vsel %vm328, %v336, %v318
    %v349 = vsel %vm329, %v336, %v319
    %v350 = vsel %vm328, %v340, %v320
    %v351 = vsel %vm329, %v340, %v321
    %v352 = vsel %vm328, %v344, %v322
    %v353 = vsel %vm329, %v344, %v323
    %vm354 = vcmp.ge.s32.totalorder %v48, 160
    %vm355 = vcmp.ge.s32.totalorder %v49, 160
    %vm356 = vcmp.lt.s32.totalorder %v48, 176
    %vm357 = vcmp.lt.s32.totalorder %v49, 176
    %vm358 = vmand %vm354, %vm356
    %vm359 = vmand %vm355, %vm357
    %360 = vset.pattern.permute.xlu0 10
    %361 = vperm.xlu0 %360, %v43
    %v362 = vpop.permute.xlu0 %361
    %364 = vset.pattern.permute.xlu0 10
    %365 = vperm.xlu0 %364, %v44
    %v366 = vpop.permute.xlu0 %365
    %368 = vset.pattern.permute.xlu0 10
    %369 = vperm.xlu0 %368, %v45
    %v370 = vpop.permute.xlu0 %369
    %372 = vset.pattern.permute.xlu0 10
    %373 = vperm.xlu0 %372, %v46
    %v374 = vpop.permute.xlu0 %373
    %v376 = vsel %vm358, %v362, %v346
    %v377 = vsel %vm359, %v362, %v347
    %v378 = vsel %vm358, %v366, %v348
    %v379 = vsel %vm359, %v366, %v349
    %v380 = vsel %vm358, %v370, %v350
    %v381 = vsel %vm359, %v370, %v351
    %v382 = vsel %vm358, %v374, %v352
    %v383 = vsel %vm359, %v374, %v353
    %vm384 = vcmp.ge.s32.totalorder %v48, 176
    %vm385 = vcmp.ge.s32.totalorder %v49, 176
    %vm386 = vcmp.lt.s32.totalorder %v48, 192
    %vm387 = vcmp.lt.s32.totalorder %v49, 192
    %vm388 = vmand %vm384, %vm386
    %vm389 = vmand %vm385, %vm387
    %390 = vset.pattern.permute.xlu0 11
    %391 = vperm.xlu0 %390, %v43
    %v392 = vpop.permute.xlu0 %391
    %394 = vset.pattern.permute.xlu0 11
    %395 = vperm.xlu0 %394, %v44
    %v396 = vpop.permute.xlu0 %395
    %398 = vset.pattern.permute.xlu0 11
    %399 = vperm.xlu0 %398, %v45
    %v400 = vpop.permute.xlu0 %399
    %402 = vset.pattern.permute.xlu0 11
    %403 = vperm.xlu0 %402, %v46
    %v404 = vpop.permute.xlu0 %403
    %v406 = vsel %vm388, %v392, %v376
    %v407 = vsel %vm389, %v392, %v377
    %v408 = vsel %vm388, %v396, %v378
    %v409 = vsel %vm389, %v396, %v379
    %v410 = vsel %vm388, %v400, %v380
    %v411 = vsel %vm389, %v400, %v381
    %v412 = vsel %vm388, %v404, %v382
    %v413 = vsel %vm389, %v404, %v383
    %v414 = vld [vmem:[%s2] sm:$0xff]
    %v415 = vld [vmem:[%s2 + $0x8] sm:$0xff]
    %v416 = vld [vmem:[%s2 + $0x10] sm:$0xff]
    %v417 = vld [vmem:[%s2 + $0x18] sm:$0xff]
    %v418 = vld [vmem:[%s2 + $0x20] sm:$0xff]
    %v419 = vld [vmem:[%s2 + $0x28] sm:$0xff]
    %v420 = vld [vmem:[%s2 + $0x30] sm:$0xff]
    %v421 = vld [vmem:[%s2 + $0x38] sm:$0xff]
    %v422 = vmul.f32 %v406, %v414
    %v423 = vmul.f32 %v407, %v415
    %v424 = vmul.f32 %v408, %v416
    %v425 = vmul.f32 %v409, %v417
    %v426 = vmul.f32 %v410, %v418
    %v427 = vmul.f32 %v411, %v419
    %v428 = vmul.f32 %v412, %v420
    %v429 = vmul.f32 %v413, %v421
    %430 = vst [vmem:[#allocation2] sm:$0xff] %v422
    %vm431 = vcmask 523264
    %432 = vst.msk [vmem:[#allocation2 + $0x8] sm:$0xff] %vm431, %v423
    %433 = vst [vmem:[#allocation2 + $0x10] sm:$0xff] %v424
    %434 = vst.msk [vmem:[#allocation2 + $0x18] sm:$0xff] %vm431, %v425
    %435 = vst [vmem:[#allocation2 + $0x20] sm:$0xff] %v426
    %436 = vst.msk [vmem:[#allocation2 + $0x28] sm:$0xff] %vm431, %v427
    %437 = vst [vmem:[#allocation2 + $0x30] sm:$0xff] %v428
    %438 = vst.msk [vmem:[#allocation2 + $0x38] sm:$0xff] %vm431, %v429
    // Predicated region
    $region14: #{tpu_custom_call.1} parent=1 // pred_check
      _
    $region15: #{tpu_custom_call.1} parent=1 // pred_check_branch
      %440 = sbr.rel (0) target = $region17
    $region16: #{tpu_custom_call.1} parent=1 // pred_region
      %s442 = ssub.s32 1024, 1024
      %443 = vsyncadd [#allocation3], %s442
      %s444 = sshll.u32 [#allocation2], 4
      %s445 = int_to_ptr.vmem [resolvable:$true] %s444
      %450 = dma.vmem_to_hbm [thread:$0]  %s445, 1024, %s3, [#allocation3], 256, 256, 16
    $region17: #{tpu_custom_call.1} parent=1 // pred_fallthru
      _
    // Predicated region
    $region18: #{tpu_custom_call.1} parent=1 // pred_check
      _
    $region19: #{tpu_custom_call.1} parent=1 // pred_check_branch
      %452 = sbr.rel (0) target = $region21
    $region20: #{tpu_custom_call.1} parent=1 // pred_region
      %453 = dma.done [#allocation3], 1024
    $region21: #{tpu_custom_call.1} parent=1 // pred_fallthru
      _
    %454 = vsyncpa [#allocation3], 1

</llo_original>
